<compile_context>
chip_gen: v7x
topology: tpu7x:2x2x1
jax: 0.10.0
libtpu: 0.0.40
codegen_flags: <defaults>
</compile_context>

<pallas_src>
import functools

import jax
import jax.numpy as jnp
from jax.experimental import pallas as pl
from jax.experimental.pallas import tpu as pltpu

LOG_SCALE_BOUNDS = (-200.0, 2.0)
LANE = 128          # pad feature dims to lane width -> lane-dense MXU/out tiles
ROW_ALIGN = 16      # bf16 sublane packing (covers f32's 8 as well)
NEG_INF = -1e30     # finite "-inf" for masked softmax lanes
TILE_L_MAX = 1024   # per-tile rows; ~1.5 MiB double-buffered VMEM at lane=128


def _round_up(x, m):
    return (x + m - 1) // m * m


def _pad2d(x, rows, cols):
    return jnp.pad(x, ((0, rows - x.shape[0]), (0, cols - x.shape[1])))


# ---------------------------------------------------------------------------
# Pallas kernels (one launch per forward)
# ---------------------------------------------------------------------------
def _mlp_loc_kernel(obs_ref, w1_ref, b1_ref, w2_ref, b2_ref, loc_ref):
    # bf16 operands on the MXU, f32 accumulation, f32 activations.
    h = jnp.tanh(
        jnp.dot(obs_ref[...], w1_ref[...], preferred_element_type=jnp.float32)
        + b1_ref[...]
    )
    loc_ref[...] = (
        jnp.dot(h.astype(w2_ref.dtype), w2_ref[...],
                preferred_element_type=jnp.float32)
        + b2_ref[...]
    )


def _mlp_categorical_kernel(obs_ref, w1_ref, b1_ref, w2_ref, b2_ref,
                            logits_ref, lse_ref):
    # Pad lanes of b2 were set to NEG_INF at init -> pad logits are NEG_INF
    # without any iota/where masking in the kernel.
    h = jnp.tanh(
        jnp.dot(obs_ref[...], w1_ref[...], preferred_element_type=jnp.float32)
        + b1_ref[...]
    )
    logits = (
        jnp.dot(h.astype(w2_ref.dtype), w2_ref[...],
                preferred_element_type=jnp.float32)
        + b2_ref[...]
    )
    logits_ref[...] = logits
    m = jnp.max(logits, axis=-1, keepdims=True)
    lse_ref[...] = m + jnp.log(
        jnp.sum(jnp.exp(logits - m), axis=-1, keepdims=True))


def _cost(lp, dp, hp, ap, discrete):
    flops = 2 * lp * dp * hp + 2 * lp * hp * ap
    trans = lp * hp + (lp * ap if discrete else 0)          # tanh (+ exp/log)
    bytes_acc = (2 * (lp * dp + dp * hp + hp * ap)          # bf16 obs + weights
                 + 4 * (hp + ap)                            # f32 biases
                 + 4 * lp * ap                              # f32 loc/logits out
                 + (4 * lp if discrete else 0))             # f32 lse column
    return pl.CostEstimate(flops=int(flops), transcendentals=int(trans),
                           bytes_accessed=int(bytes_acc))


def _launch(kernel, obs_p, w1p, b1p, w2p, b2p, *, tile_l, discrete):
    lp, dp = obs_p.shape
    hp, ap = w2p.shape
    grid = (lp // tile_l,)

    loc_shape = jax.ShapeDtypeStruct((lp, ap), jnp.float32)
    if discrete:
        out_shape = (loc_shape, jax.ShapeDtypeStruct((lp, 1), jnp.float32))
        out_specs = (pl.BlockSpec((tile_l, ap), lambda i: (i, 0)),
                     pl.BlockSpec((tile_l, 1), lambda i: (i, 0)))
    else:
        out_shape = loc_shape
        out_specs = pl.BlockSpec((tile_l, ap), lambda i: (i, 0))

    return pl.pallas_call(
        kernel,
        out_shape=out_shape,
        grid=grid,
        in_specs=[
            pl.BlockSpec((tile_l, dp), lambda i: (i, 0)),   # obs tile (bf16)
            pl.BlockSpec((dp, hp), lambda i: (0, 0)),       # w1 resident
            pl.BlockSpec((1, hp), lambda i: (0, 0)),        # b1 resident
            pl.BlockSpec((hp, ap), lambda i: (0, 0)),       # w2 resident
            pl.BlockSpec((1, ap), lambda i: (0, 0)),        # b2 resident
        ],
        out_specs=out_specs,
        compiler_params=pltpu.CompilerParams(
            dimension_semantics=("parallel",)),
        cost_estimate=_cost(lp, dp, hp, ap, discrete),
    )(obs_p, w1p, b1p, w2p, b2p)


# ---------------------------------------------------------------------------
# Jitted forwards (single XLA executable per call: pad + kernel + epilogue)
# ---------------------------------------------------------------------------
def _prep_obs(obs, dp):
    L = obs.shape[0]
    tile_l = min(TILE_L_MAX, _round_up(L, ROW_ALIGN))
    lp = _round_up(L, tile_l)
    obs_p = _pad2d(obs.astype(jnp.float32), lp, dp).astype(jnp.bfloat16)
    return obs_p, L, tile_l


@functools.partial(jax.jit, static_argnames=("act_dim",))
def _forward_continuous(obs, w1p, b1p, w2p, b2p, log_std, *, act_dim):
    obs_p, L, tile_l = _prep_obs(obs, w1p.shape[0])
    loc_p = _launch(_mlp_loc_kernel, obs_p, w1p, b1p, w2p, b2p,
                    tile_l=tile_l, discrete=False)
    loc = loc_p[:L, :act_dim]
    lo, hi = LOG_SCALE_BOUNDS
    scale = jnp.broadcast_to(jnp.exp(jnp.clip(log_std, lo, hi)), (L, act_dim))
    return loc, scale


@functools.partial(jax.jit, static_argnames=("act_dim",))
def _forward_discrete(obs, w1p, b1p, w2p, b2p, *, act_dim):
    obs_p, L, tile_l = _prep_obs(obs, w1p.shape[0])
    logits_p, lse_p = _launch(_mlp_categorical_kernel, obs_p, w1p, b1p, w2p,
                              b2p, tile_l=tile_l, discrete=True)
    logits = logits_p[:L, :act_dim]
    log_probs = logits - lse_p[:L]
    return logits, log_probs


# ---------------------------------------------------------------------------
# Policy wrapper
# ---------------------------------------------------------------------------
class PolicyBasePallas:
    """JAX/Pallas analogue of PolicyBase's default policy + distribution."""

    def __init__(self, obs_dim, act_dim, hidden_dim, is_discrete, key):
        self.is_discrete = is_discrete
        self.obs_dim, self.act_dim, self.hidden_dim = obs_dim, act_dim, hidden_dim

        k1, k2, k3, k4 = jax.random.split(key, 4)
        s1 = 1.0 / jnp.sqrt(obs_dim)
        s2 = 1.0 / jnp.sqrt(hidden_dim)
        self.w1 = jax.random.uniform(k1, (obs_dim, hidden_dim), jnp.float32, -s1, s1)
        self.b1 = jax.random.uniform(k2, (1, hidden_dim), jnp.float32, -s1, s1)
        self.w2 = jax.random.uniform(k3, (hidden_dim, act_dim), jnp.float32, -s2, s2)
        self.b2 = jax.random.uniform(k4, (1, act_dim), jnp.float32, -s2, s2)
        # build_log_std(action_shape): zero-initialized learnable log-std.
        self.log_std = None if is_discrete else jnp.zeros((1, act_dim), jnp.float32)

        # Pad params to lane width ONCE.  MXU operands (weights) kept in bf16;
        # biases stay f32 (added post-matmul in f32).
        dp = _round_up(obs_dim, LANE)
        hp = _round_up(hidden_dim, LANE)
        ap = _round_up(act_dim, LANE)
        self._w1p = _pad2d(self.w1, dp, hp).astype(jnp.bfloat16)
        self._b1p = _pad2d(self.b1, 1, hp)
        self._w2p = _pad2d(self.w2, hp, ap).astype(jnp.bfloat16)
        b2p = _pad2d(self.b2, 1, ap)
        if is_discrete:
            # Bake the softmax mask into the bias pad lanes (free in-kernel).
            b2p = b2p.at[:, act_dim:].set(NEG_INF)
        self._b2p = b2p

    def forward(self, obs):
        if self.is_discrete:
            logits, log_probs = _forward_discrete(
                obs, self._w1p, self._b1p, self._w2p, self._b2p,
                act_dim=self.act_dim)
            return {"logits": logits, "log_probs": log_probs}
        loc, scale = _forward_continuous(
            obs, self._w1p, self._b1p, self._w2p, self._b2p, self.log_std,
            act_dim=self.act_dim)
        return {"loc": loc, "scale": scale}


# ---------------------------------------------------------------------------
# Main
# ---------------------------------------------------------------------------
if __name__ == "__main__":
    key = jax.random.PRNGKey(0)
    k_obs, k_params_c, k_params_d = jax.random.split(key, 3)

    L, OBS_DIM, HIDDEN, ACT_DIM, N_ACTIONS = 8, 16, 32, 4, 6
    obs = jax.random.normal(k_obs, (L, OBS_DIM), jnp.float32)

    # Continuous-action policy: Normal(loc, scale)
    policy_c = PolicyBasePallas(OBS_DIM, ACT_DIM, HIDDEN, is_discrete=False,
                                key=k_params_c)
    dist_c = policy_c.forward(obs)
    jax.block_until_ready(dist_c["loc"])
    jax.block_until_ready(dist_c["scale"])

    # Discrete-action policy: Categorical(logits=loc)
    policy_d = PolicyBasePallas(OBS_DIM, N_ACTIONS, HIDDEN, is_discrete=True,
                                key=k_params_d)
    dist_d = policy_d.forward(obs)
    jax.block_until_ready(dist_d["logits"])
    jax.block_until_ready(dist_d["log_probs"])

    # References using the same bf16-operand / f32-accumulate pipeline.
    def ref_loc(p):
        h = jnp.tanh(jnp.dot(obs.astype(jnp.bfloat16),
                             p.w1.astype(jnp.bfloat16),
                             preferred_element_type=jnp.float32) + p.b1)
        return jnp.dot(h.astype(jnp.bfloat16), p.w2.astype(jnp.bfloat16),
                       preferred_element_type=jnp.float32) + p.b2

    ref_c = ref_loc(policy_c)
    assert jnp.allclose(dist_c["loc"], ref_c, atol=1e-4), "continuous loc mismatch"
    ref_c_f32 = jnp.tanh(obs @ policy_c.w1 + policy_c.b1) @ policy_c.w2 + policy_c.b2
    assert jnp.allclose(dist_c["loc"], ref_c_f32, atol=5e-2), "continuous loc far off f32"
    ref_scale = jnp.broadcast_to(
        jnp.exp(jnp.clip(policy_c.log_std, *LOG_SCALE_BOUNDS)), (L, ACT_DIM))
    assert jnp.allclose(dist_c["scale"], ref_scale, atol=1e-6), "scale mismatch"

    ref_d = ref_loc(policy_d)
    assert jnp.allclose(dist_d["logits"], ref_d, atol=1e-4), "discrete logits mismatch"
    ref_lp = jax.nn.log_softmax(ref_d, axis=-1)
    assert jnp.allclose(dist_d["log_probs"], ref_lp, atol=1e-4), "log_softmax mismatch"

    print("KERNEL_OK")
</pallas_src>

<mosaic_0001>
module attributes {stable_mosaic.version = 11 : i64} {
  func.func @_mlp_loc_kernel(%arg0: i32, %arg1: memref<16x128xbf16, #tpu.memory_space<vmem>>, %arg2: memref<128x128xbf16, #tpu.memory_space<vmem>>, %arg3: memref<1x128xf32, #tpu.memory_space<vmem>>, %arg4: memref<128x128xbf16, #tpu.memory_space<vmem>>, %arg5: memref<1x128xf32, #tpu.memory_space<vmem>>, %arg6: memref<16x128xf32, #tpu.memory_space<vmem>>) attributes {dimension_semantics = [#tpu.dimension_semantics<parallel>], iteration_bounds = array<i64: 1>, scalar_prefetch = 0 : i64, scratch_operands = 0 : i64, tpu.core_type = #tpu.core_type<tc>, window_params = [{transform_indices = @transform_0, window_bounds = array<i64: 16, 128>}, {pipeline_mode = #tpu.pipeline_mode<synchronous>, transform_indices = @transform_1, window_bounds = array<i64: 128, 128>}, {pipeline_mode = #tpu.pipeline_mode<synchronous>, transform_indices = @transform_2, window_bounds = array<i64: 1, 128>}, {pipeline_mode = #tpu.pipeline_mode<synchronous>, transform_indices = @transform_3, window_bounds = array<i64: 128, 128>}, {pipeline_mode = #tpu.pipeline_mode<synchronous>, transform_indices = @transform_4, window_bounds = array<i64: 1, 128>}, {transform_indices = @transform_5, window_bounds = array<i64: 16, 128>}]} {
    %c0 = arith.constant 0 : index
    %c0_0 = arith.constant 0 : index
    %0 = vector.load %arg1[%c0, %c0_0] : memref<16x128xbf16, #tpu.memory_space<vmem>>, vector<16x128xbf16>
    %c0_1 = arith.constant 0 : index
    %c0_2 = arith.constant 0 : index
    %1 = vector.load %arg2[%c0_1, %c0_2] : memref<128x128xbf16, #tpu.memory_space<vmem>>, vector<128x128xbf16>
    %cst = arith.constant dense<0.000000e+00> : vector<16x128xf32>
    %2 = tpu.matmul %0, %1, %cst {dimension_numbers = #tpu.dot_dimension_numbers<[1], [0], [0], [1], [0, 0, 1, 1], [], []>} : vector<16x128xbf16>, vector<128x128xbf16>, vector<16x128xf32> -> vector<16x128xf32>
    %c0_3 = arith.constant 0 : index
    %c0_4 = arith.constant 0 : index
    %3 = vector.load %arg3[%c0_3, %c0_4] : memref<1x128xf32, #tpu.memory_space<vmem>>, vector<1x128xf32>
    %4 = vector.broadcast %3 : vector<1x128xf32> to vector<16x128xf32>
    %5 = arith.addf %2, %4 : vector<16x128xf32>
    %6 = math.tanh %5 : vector<16x128xf32>
    %7 = arith.truncf %6 : vector<16x128xf32> to vector<16x128xbf16>
    %c0_5 = arith.constant 0 : index
    %c0_6 = arith.constant 0 : index
    %8 = vector.load %arg4[%c0_5, %c0_6] : memref<128x128xbf16, #tpu.memory_space<vmem>>, vector<128x128xbf16>
    %cst_7 = arith.constant dense<0.000000e+00> : vector<16x128xf32>
    %9 = tpu.matmul %7, %8, %cst_7 {dimension_numbers = #tpu.dot_dimension_numbers<[1], [0], [0], [1], [0, 0, 1, 1], [], []>} : vector<16x128xbf16>, vector<128x128xbf16>, vector<16x128xf32> -> vector<16x128xf32>
    %c0_8 = arith.constant 0 : index
    %c0_9 = arith.constant 0 : index
    %10 = vector.load %arg5[%c0_8, %c0_9] : memref<1x128xf32, #tpu.memory_space<vmem>>, vector<1x128xf32>
    %11 = vector.broadcast %10 : vector<1x128xf32> to vector<16x128xf32>
    %12 = arith.addf %9, %11 : vector<16x128xf32>
    %c0_10 = arith.constant 0 : index
    %c0_11 = arith.constant 0 : index
    %13 = vector.load %arg6[%c0_10, %c0_11] : memref<16x128xf32, #tpu.memory_space<vmem>>, vector<16x128xf32>
    tpu.vector_store %arg6[%c0_10, %c0_11], %12 {strides = array<i32>} : memref<16x128xf32, #tpu.memory_space<vmem>>, vector<16x128xf32>,
    return
  }
  func.func @transform_0(%arg0: i32) -> (i32, i32) {
    %c0_i32 = arith.constant 0 : i32
    %c0_i32_0 = arith.constant 0 : i32
    return %arg0, %c0_i32 : i32, i32
  }
  func.func @transform_1(%arg0: i32) -> (i32, i32) {
    %c0_i32 = arith.constant 0 : i32
    %c0_i32_0 = arith.constant 0 : i32
    %c0_i32_1 = arith.constant 0 : i32
    return %c0_i32, %c0_i32_0 : i32, i32
  }
  func.func @transform_2(%arg0: i32) -> (i32, i32) {
    %c0_i32 = arith.constant 0 : i32
    %c0_i32_0 = arith.constant 0 : i32
    %c0_i32_1 = arith.constant 0 : i32
    return %c0_i32, %c0_i32_0 : i32, i32
  }
  func.func @transform_3(%arg0: i32) -> (i32, i32) {
    %c0_i32 = arith.constant 0 : i32
    %c0_i32_0 = arith.constant 0 : i32
    %c0_i32_1 = arith.constant 0 : i32
    return %c0_i32, %c0_i32_0 : i32, i32
  }
  func.func @transform_4(%arg0: i32) -> (i32, i32) {
    %c0_i32 = arith.constant 0 : i32
    %c0_i32_0 = arith.constant 0 : i32
    %c0_i32_1 = arith.constant 0 : i32
    return %c0_i32, %c0_i32_0 : i32, i32
  }
  func.func @transform_5(%arg0: i32) -> (i32, i32) {
    %c0_i32 = arith.constant 0 : i32
    %c0_i32_0 = arith.constant 0 : i32
    return %arg0, %c0_i32 : i32, i32
  }
}

</mosaic_0001>

<llo_original>
// kernel: _forward_continuous.1
$region0: #{_forward_continuous.1}
  #allocation0 [shape = 'u32[]', space=smem, size = 0x4, offset = 0x4, fixed_abs, tag = 'smem constant byte address 0x4 - core index']
  #allocation1 [shape = 'u32[144,128]{1,0:T(1,128)}', space=vmem, size = 0x12000, scoped, tag = 'internal scratch']
  %s0 = inlined_call_operand.vmem [shape: bf16[16,128], index: 0, kind: input, shape index: {}]
  %s1 = inlined_call_operand.hbm [shape: bf16[128,128], index: 1, kind: input, shape index: {}]
  %s2 = inlined_call_operand.vmem [shape: f32[1,128], index: 2, kind: input, shape index: {}]
  %s3 = inlined_call_operand.hbm [shape: bf16[128,128], index: 3, kind: input, shape index: {}]
  %s4 = inlined_call_operand.vmem [shape: f32[1,128], index: 4, kind: input, shape index: {}]
  %s5 = inlined_call_operand.vmem [shape: f32[16,128], index: 5, kind: output, shape index: {}]
  %s6 = sld [smem:[#allocation0]]
  $region38: #{_forward_continuous.1} parent=0
    _
  %s8 = ssub.s32 1, %s6
  %s9 = scalar_select 0, %s8, %s6
  $region1: #{_forward_continuous.1} parent=0
    #allocation2 [shape = 'u8[32768]{0}', space=vmem, size = 0x8000, scoped, tag = 'input window, operand 1, single buffered']
    #allocation3 [shape = 's32[1]{0}', space=sflag, size = 0x4, scoped, tag = 'scoped memory for _forward_continuous.1']
    #allocation4 [shape = 'u8[32768]{0}', space=vmem, size = 0x8000, scoped, tag = 'input window, operand 3, single buffered']
    #allocation5 [shape = 's32[1]{0}', space=sflag, size = 0x4, scoped, tag = 'scoped memory for _forward_continuous.1']
    %10 = vsyncpa [#allocation3], 0
    %11 = vsyncpa [#allocation5], 0
    // Predicated region
    $region2: #{_forward_continuous.1} parent=1 // pred_check
      _
    $region3: #{_forward_continuous.1} parent=1 // pred_check_branch
      %13 = sbr.rel (0) target = $region5
    $region4: #{_forward_continuous.1} parent=1 // pred_region
      _
    $region5: #{_forward_continuous.1} parent=1 // pred_fallthru
      _
    // Predicated region
    $region6: #{_forward_continuous.1} parent=1 // pred_check
      _
    $region7: #{_forward_continuous.1} parent=1 // pred_check_branch
      %15 = sbr.rel (0) target = $region9
    $region8: #{_forward_continuous.1} parent=1 // pred_region
      %s17 = ssub.s32 1024, 1024
      %18 = vsyncadd [#allocation3], %s17
      %s19 = sshll.u32 [#allocation2], 4
      %s20 = int_to_ptr.vmem [resolvable:$true] %s19
      %25 = dma.hbm_to_vmem [thread:$0]  %s1, 1024, %s20, [#allocation3], 64, 64, 4
    $region9: #{_forward_continuous.1} parent=1 // pred_fallthru
      _
    // Predicated region
    $region10: #{_forward_continuous.1} parent=1 // pred_check
      _
    $region11: #{_forward_continuous.1} parent=1 // pred_check_branch
      %27 = sbr.rel (0) target = $region13
    $region12: #{_forward_continuous.1} parent=1 // pred_region
      _
    $region13: #{_forward_continuous.1} parent=1 // pred_fallthru
      _
    // Predicated region
    $region14: #{_forward_continuous.1} parent=1 // pred_check
      _
    $region15: #{_forward_continuous.1} parent=1 // pred_check_branch
      %29 = sbr.rel (0) target = $region17
    $region16: #{_forward_continuous.1} parent=1 // pred_region
      %s31 = ssub.s32 1024, 1024
      %32 = vsyncadd [#allocation5], %s31
      %s33 = sshll.u32 [#allocation4], 4
      %s34 = int_to_ptr.vmem [resolvable:$true] %s33
      %39 = dma.hbm_to_vmem [thread:$0]  %s3, 1024, %s34, [#allocation5], 64, 64, 4
    $region17: #{_forward_continuous.1} parent=1 // pred_fallthru
      _
    // Predicated region
    $region18: #{_forward_continuous.1} parent=1 // pred_check
      _
    $region19: #{_forward_continuous.1} parent=1 // pred_check_branch
      %41 = sbr.rel (0) target = $region21
    $region20: #{_forward_continuous.1} parent=1 // pred_region
      _
    $region21: #{_forward_continuous.1} parent=1 // pred_fallthru
      _
    // Predicated region
    $region22: #{_forward_continuous.1} parent=1 // pred_check
      _
    $region23: #{_forward_continuous.1} parent=1 // pred_check_branch
      %43 = sbr.rel (0) target = $region25
    $region24: #{_forward_continuous.1} parent=1 // pred_region
      %44 = dma.done [#allocation3], 1024
    $region25: #{_forward_continuous.1} parent=1 // pred_fallthru
      _
    // Predicated region
    $region26: #{_forward_continuous.1} parent=1 // pred_check
      _
    $region27: #{_forward_continuous.1} parent=1 // pred_check_branch
      %46 = sbr.rel (0) target = $region29
    $region28: #{_forward_continuous.1} parent=1 // pred_region
      %47 = dma.done [#allocation5], 1024
    $region29: #{_forward_continuous.1} parent=1 // pred_fallthru
      _
    %v49 = vld [vmem:[%s0] sm:$0xf]
    %v50 = vld [vmem:[%s0 + $0x4] sm:$0xf]
    %v51 = vld [vmem:[#allocation2] sm:$0xf]
    %v52 = vld [vmem:[#allocation2 + $0x4] sm:$0xf]
    %v53 = vld [vmem:[#allocation2 + $0x8] sm:$0xf]
    %v54 = vld [vmem:[#allocation2 + $0xc] sm:$0xf]
    %v55 = vld [vmem:[#allocation2 + $0x10] sm:$0xf]
    %v56 = vld [vmem:[#allocation2 + $0x14] sm:$0xf]
    %v57 = vld [vmem:[#allocation2 + $0x18] sm:$0xf]
    %v58 = vld [vmem:[#allocation2 + $0x1c] sm:$0xf]
    %v59 = vld [vmem:[#allocation2 + $0x20] sm:$0xf]
    %v60 = vld [vmem:[#allocation2 + $0x24] sm:$0xf]
    %v61 = vld [vmem:[#allocation2 + $0x28] sm:$0xf]
    %v62 = vld [vmem:[#allocation2 + $0x2c] sm:$0xf]
    %v63 = vld [vmem:[#allocation2 + $0x30] sm:$0xf]
    %v64 = vld [vmem:[#allocation2 + $0x34] sm:$0xf]
    %v65 = vld [vmem:[#allocation2 + $0x38] sm:$0xf]
    %v66 = vld [vmem:[#allocation2 + $0x3c] sm:$0xf]
    %v67 = vld [vmem:[%s2] sm:$0x1]
    %v69 = vlaneseq
    %v70 = vshrl.u32 %v69, 7
    %v71 = vsub.s32 0, %v70
    %v72 = vrot.slane %v67, %v71
    %v76 = vunpack.c.l.b16 %v49
    %v77 = vunpack.c.l.b16 %v50
    %v78 = vpack.c.b16 %v77, %v76
    %v96 = vunpack.c.l.b16 %v51
    %v97 = vunpack.c.l.b16 %v52
    %v98 = vunpack.c.l.b16 %v53
    %v99 = vunpack.c.l.b16 %v54
    %v100 = vunpack.c.l.b16 %v55
    %v101 = vunpack.c.l.b16 %v56
    %v102 = vunpack.c.l.b16 %v57
    %v103 = vunpack.c.l.b16 %v58
    %v104 = vunpack.c.l.b16 %v59
    %v105 = vunpack.c.l.b16 %v60
    %v106 = vunpack.c.l.b16 %v61
    %v107 = vunpack.c.l.b16 %v62
    %v108 = vunpack.c.l.b16 %v63
    %v109 = vunpack.c.l.b16 %v64
    %v110 = vunpack.c.l.b16 %v65
    %v111 = vunpack.c.l.b16 %v66
    %v112 = vpack.c.b16 %v97, %v96
    %v113 = vpack.c.b16 %v99, %v98
    %v114 = vpack.c.b16 %v101, %v100
    %v115 = vpack.c.b16 %v103, %v102
    %v116 = vpack.c.b16 %v105, %v104
    %v117 = vpack.c.b16 %v107, %v106
    %v118 = vpack.c.b16 %v109, %v108
    %v119 = vpack.c.b16 %v111, %v110
    %128 = vmatprep.subr.bf16.mxu0 0
    %129 = vmatpush1.bf16.msra.mxu0 %v112
    %130 = vmatprep.subr.bf16.mxu0 0
    %131 = vmatpush1.bf16.msra.mxu0 %v113
    %132 = vmatprep.subr.bf16.mxu0 0
    %133 = vmatpush1.bf16.msra.mxu0 %v114
    %134 = vmatprep.subr.bf16.mxu0 0
    %135 = vmatpush1.bf16.msra.mxu0 %v115
    %136 = vmatprep.subr.bf16.mxu0 0
    %137 = vmatpush1.bf16.msra.mxu0 %v116
    %138 = vmatprep.subr.bf16.mxu0 0
    %139 = vmatpush1.bf16.msra.mxu0 %v117
    %140 = vmatprep.subr.bf16.mxu0 0
    %141 = vmatpush1.bf16.msra.mxu0 %v118
    %142 = vmatprep.subr.bf16.mxu0 0
    %143 = vmatpush1.bf16.msra.mxu0 %v119
    %144 = vmatprep.subr.bf16.mxu0 0
    %145 = vmatpush1.bf16.msra.mxu0 0
    %146 = vmatprep.subr.bf16.mxu0 0
    %147 = vmatpush1.bf16.msra.mxu0 0
    %148 = vmatprep.subr.bf16.mxu0 0
    %149 = vmatpush1.bf16.msra.mxu0 0
    %150 = vmatprep.subr.bf16.mxu0 0
    %151 = vmatpush1.bf16.msra.mxu0 0
    %152 = vmatprep.subr.bf16.mxu0 0
    %153 = vmatpush1.bf16.msra.mxu0 0
    %154 = vmatprep.subr.bf16.mxu0 0
    %155 = vmatpush1.bf16.msra.mxu0 0
    %156 = vmatprep.subr.bf16.mxu0 0
    %157 = vmatpush1.bf16.msra.mxu0 0
    %158 = vmatprep.subr.bf16.mxu0 0
    %159 = vmatpush1.bf16.msra.mxu0 0
    %160 = vmatprep.mubr.bf16.mxu0 0
    %161 = vmatmul.mubr.bf16.gmra.mrb[0].mxu0 %v78
    %v162 = vpop.f32.mrb[0].mxu0
    %v163 = vadd.f32 %v72, %v162
    %v164 = vpop.f32.mrb[0].mxu0
    %v165 = vpop.f32.mrb[0].mxu0
    %v166 = vadd.f32 %v72, %v165
    %v167 = vpop.f32.mrb[0].mxu0
    %168 = vdwg.mxu0
    %v169 = vtanh.pop %v163
    %v170 = vtanh.pop %v166
    %v171 = vpack.c.bf16 %v170, %v169
    %v172 = vld [vmem:[#allocation4] sm:$0xf]
    %v173 = vld [vmem:[#allocation4 + $0x4] sm:$0xf]
    %v174 = vld [vmem:[#allocation4 + $0x8] sm:$0xf]
    %v175 = vld [vmem:[#allocation4 + $0xc] sm:$0xf]
    %v176 = vld [vmem:[#allocation4 + $0x10] sm:$0xf]
    %v177 = vld [vmem:[#allocation4 + $0x14] sm:$0xf]
    %v178 = vld [vmem:[#allocation4 + $0x18] sm:$0xf]
    %v179 = vld [vmem:[#allocation4 + $0x1c] sm:$0xf]
    %v180 = vld [vmem:[#allocation4 + $0x20] sm:$0xf]
    %v181 = vld [vmem:[#allocation4 + $0x24] sm:$0xf]
    %v182 = vld [vmem:[#allocation4 + $0x28] sm:$0xf]
    %v183 = vld [vmem:[#allocation4 + $0x2c] sm:$0xf]
    %v184 = vld [vmem:[#allocation4 + $0x30] sm:$0xf]
    %v185 = vld [vmem:[#allocation4 + $0x34] sm:$0xf]
    %v186 = vld [vmem:[#allocation4 + $0x38] sm:$0xf]
    %v187 = vld [vmem:[#allocation4 + $0x3c] sm:$0xf]
    %v188 = vld [vmem:[%s4] sm:$0x1]
    %v190 = vlaneseq
    %v191 = vshrl.u32 %v190, 7
    %v192 = vsub.s32 0, %v191
    %v193 = vrot.slane %v188, %v192
    %v211 = vunpack.c.l.b16 %v172
    %v212 = vunpack.c.l.b16 %v173
    %v213 = vunpack.c.l.b16 %v174
    %v214 = vunpack.c.l.b16 %v175
    %v215 = vunpack.c.l.b16 %v176
    %v216 = vunpack.c.l.b16 %v177
    %v217 = vunpack.c.l.b16 %v178
    %v218 = vunpack.c.l.b16 %v179
    %v219 = vunpack.c.l.b16 %v180
    %v220 = vunpack.c.l.b16 %v181
    %v221 = vunpack.c.l.b16 %v182
    %v222 = vunpack.c.l.b16 %v183
    %v223 = vunpack.c.l.b16 %v184
    %v224 = vunpack.c.l.b16 %v185
    %v225 = vunpack.c.l.b16 %v186
    %v226 = vunpack.c.l.b16 %v187
    %v227 = vpack.c.b16 %v212, %v211
    %v228 = vpack.c.b16 %v214, %v213
    %v229 = vpack.c.b16 %v216, %v215
    %v230 = vpack.c.b16 %v218, %v217
    %v231 = vpack.c.b16 %v220, %v219
    %v232 = vpack.c.b16 %v222, %v221
    %v233 = vpack.c.b16 %v224, %v223
    %v234 = vpack.c.b16 %v226, %v225
    %243 = vmatprep.subr.bf16.mxu0 0
    %244 = vmatpush1.bf16.msra.mxu0 %v227
    %245 = vmatprep.subr.bf16.mxu0 0
    %246 = vmatpush1.bf16.msra.mxu0 %v228
    %247 = vmatprep.subr.bf16.mxu0 0
    %248 = vmatpush1.bf16.msra.mxu0 %v229
    %249 = vmatprep.subr.bf16.mxu0 0
    %250 = vmatpush1.bf16.msra.mxu0 %v230
    %251 = vmatprep.subr.bf16.mxu0 0
    %252 = vmatpush1.bf16.msra.mxu0 %v231
    %253 = vmatprep.subr.bf16.mxu0 0
    %254 = vmatpush1.bf16.msra.mxu0 %v232
    %255 = vmatprep.subr.bf16.mxu0 0
    %256 = vmatpush1.bf16.msra.mxu0 %v233
    %257 = vmatprep.subr.bf16.mxu0 0
    %258 = vmatpush1.bf16.msra.mxu0 %v234
    %259 = vmatprep.subr.bf16.mxu0 0
    %260 = vmatpush1.bf16.msra.mxu0 0
    %261 = vmatprep.subr.bf16.mxu0 0
    %262 = vmatpush1.bf16.msra.mxu0 0
    %263 = vmatprep.subr.bf16.mxu0 0
    %264 = vmatpush1.bf16.msra.mxu0 0
    %265 = vmatprep.subr.bf16.mxu0 0
    %266 = vmatpush1.bf16.msra.mxu0 0
    %267 = vmatprep.subr.bf16.mxu0 0
    %268 = vmatpush1.bf16.msra.mxu0 0
    %269 = vmatprep.subr.bf16.mxu0 0
    %270 = vmatpush1.bf16.msra.mxu0 0
    %271 = vmatprep.subr.bf16.mxu0 0
    %272 = vmatpush1.bf16.msra.mxu0 0
    %273 = vmatprep.subr.bf16.mxu0 0
    %274 = vmatpush1.bf16.msra.mxu0 0
    %275 = vmatprep.mubr.bf16.mxu0 0
    %276 = vmatmul.mubr.bf16.gmra.mrb[0].mxu0 %v171
    %v277 = vpop.f32.mrb[0].mxu0
    %v278 = vadd.f32 %v193, %v277
    %v279 = vpop.f32.mrb[0].mxu0
    %v280 = vpop.f32.mrb[0].mxu0
    %v281 = vadd.f32 %v193, %v280
    %v282 = vpop.f32.mrb[0].mxu0
    %283 = vdwg.mxu0
    %284 = vst [vmem:[%s5] sm:$0xff] %v278
    %285 = vst [vmem:[%s5 + $0x8] sm:$0xff] %v281
    // Predicated region
    $region30: #{_forward_continuous.1} parent=1 // pred_check
      _
    $region31: #{_forward_continuous.1} parent=1 // pred_check_branch
      %287 = sbr.rel (0) target = $region33
    $region32: #{_forward_continuous.1} parent=1 // pred_region
      _
    $region33: #{_forward_continuous.1} parent=1 // pred_fallthru
      _
    // Predicated region
    $region34: #{_forward_continuous.1} parent=1 // pred_check
      _
    $region35: #{_forward_continuous.1} parent=1 // pred_check_branch
      %289 = sbr.rel (0) target = $region37
    $region36: #{_forward_continuous.1} parent=1 // pred_region
      _
    $region37: #{_forward_continuous.1} parent=1 // pred_fallthru
      _
    %290 = vsyncpa [#allocation3], 1
    %291 = vsyncpa [#allocation5], 1

</llo_original>
